<compile_context>
chip_gen: v5e
topology: v5e:2x2
jax: 0.10.0
libtpu: 0.0.40
codegen_flags: <defaults>
</compile_context>

<pallas_src>
import jax
import jax.numpy as jnp
from jax.experimental import pallas as pl
from jax.experimental.pallas import tpu as pltpu


def dsw_embed_kernel(x_ref, w_ref, b_ref, pool_ref, gbcast_ref, beta_ref, o_ref):
    # x_ref:      (TM, P*seg_len)   packed input rows (lane-dense, bf16)
    # w_ref:      (P*seg_len, P*d_model)  block-diag *column-centered* weight (bf16)
    # b_ref:      (1, P*d_model)    centered bias, f32
    # pool_ref:   (P*d_model, P)    group-mean pooling (1/d_model blocks, bf16)
    # gbcast_ref: (P, P*d_model)    group -> lanes broadcast with gamma folded in (bf16)
    # beta_ref:   (1, P*d_model)    LayerNorm beta, f32
    #
    # Main matmul: produces the already mean-centered activations c
    # (centering is folded into w_ref / b_ref in the wrapper).
    c = jnp.dot(x_ref[...], w_ref[...],
                preferred_element_type=jnp.float32) + b_ref[...]          # (TM, P*D) f32

    # Group variance via E[c^2] (c is centered, so this IS the variance).
    cl = c.astype(pool_ref.dtype)
    var = jnp.dot(cl * cl, pool_ref[...],
                  preferred_element_type=jnp.float32)                     # (TM, P)
    inv = jax.lax.rsqrt(var + 1e-5)

    # Broadcast inv back across each d_model-wide lane group, gamma folded in.
    scale = jnp.dot(inv.astype(gbcast_ref.dtype), gbcast_ref[...],
                    preferred_element_type=jnp.float32)                   # (TM, P*D)

    o_ref[...] = (c * scale + beta_ref[...]).astype(o_ref.dtype)


def dsw_embedding(x, params, seg_len, d_model, *, tile_packed=1024, pack=16,
                  compute_dtype=jnp.bfloat16, out_dtype=jnp.bfloat16):
    """x: (batch, ts_len, ts_dim) -> (batch, ts_dim, seg_num, d_model)."""
    batch, ts_len, ts_dim = x.shape
    assert ts_len % seg_len == 0
    seg_num = ts_len // seg_len

    w1, b1, w2, b2, gamma, beta = params

    # Fold the two Linears (no nonlinearity between them) into one, then fold
    # the LayerNorm mean subtraction into the weights (centering commutes
    # with the affine map):  c = x @ W_c + b_c  is already mean-centered.
    w_fold = w1.astype(jnp.float32) @ w2.astype(jnp.float32)            # (L, D)
    b_fold = b1.astype(jnp.float32) @ w2.astype(jnp.float32) + b2.astype(jnp.float32)
    w_c = w_fold - jnp.mean(w_fold, axis=1, keepdims=True)              # (L, D)
    b_c = b_fold - jnp.mean(b_fold, axis=1, keepdims=True)              # (1, D)

    # Glue rearrange: 'b (seg_num seg_len) d -> (b d seg_num) seg_len'
    # (one XLA transpose, already emitted in compute_dtype to halve its bytes)
    x_seg = (x.astype(compute_dtype)
               .reshape(batch, seg_num, seg_len, ts_dim)
               .transpose(0, 3, 1, 2)
               .reshape(batch * ts_dim * seg_num, seg_len))
    n_rows = x_seg.shape[0]

    # ---- Lane-dense packing: P logical rows per physical row ---------------
    P = pack
    ks = P * seg_len                       # packed input width  (128 for seg_len=8)
    kd = P * d_model                       # packed output width (512 for d_model=32)

    n_packed = -(-n_rows // P)             # ceil div
    # Tile of packed rows: multiple of 8 sublanes, capped by tile_packed, and
    # sized so the grid has >= 2 steps whenever possible (v7x megacore).
    half = ((-(-n_packed // 2) + 7) // 8) * 8
    tile_p = max(8, min(tile_packed, half))
    n_packed_pad = -(-n_packed // tile_p) * tile_p
    n_rows_pad = n_packed_pad * P
    if n_rows_pad != n_rows:
        x_seg = jnp.pad(x_seg, ((0, n_rows_pad - n_rows), (0, 0)))
    x_packed = x_seg.reshape(n_packed_pad, ks)          # free row-major reshape

    # Block-diagonal operators: packed matmul == P independent row matmuls.
    eye_p = jnp.eye(P, dtype=jnp.float32)
    w_bd = jnp.kron(eye_p, w_c).astype(compute_dtype)                           # (ks, kd)
    b_p = jnp.tile(b_c.reshape(1, d_model), (1, P))                             # (1, kd) f32
    beta_p = jnp.tile(beta.reshape(1, d_model).astype(jnp.float32), (1, P))     # (1, kd) f32
    pool = jnp.kron(eye_p, jnp.full((d_model, 1), 1.0 / d_model, jnp.float32)
                    ).astype(compute_dtype)                                     # (kd, P)
    gbcast = jnp.kron(eye_p, gamma.reshape(1, d_model).astype(jnp.float32)
                      ).astype(compute_dtype)                                   # (P, kd)

    grid = (n_packed_pad // tile_p,)
    out = pl.pallas_call(
        dsw_embed_kernel,
        out_shape=jax.ShapeDtypeStruct((n_packed_pad, kd), out_dtype),
        grid_spec=pltpu.PrefetchScalarGridSpec(
            num_scalar_prefetch=0,
            grid=grid,
            in_specs=[
                pl.BlockSpec((tile_p, ks), lambda i: (i, 0)),   # packed x rows
                pl.BlockSpec((ks, kd),     lambda i: (0, 0)),   # block-diag centered W
                pl.BlockSpec((1, kd),      lambda i: (0, 0)),   # centered bias
                pl.BlockSpec((kd, P),      lambda i: (0, 0)),   # group-mean pool
                pl.BlockSpec((P, kd),      lambda i: (0, 0)),   # gamma-folded broadcast
                pl.BlockSpec((1, kd),      lambda i: (0, 0)),   # beta
            ],
            out_specs=pl.BlockSpec((tile_p, kd), lambda i: (i, 0)),
        ),
        compiler_params=pltpu.CompilerParams(
            dimension_semantics=("parallel",),
            # Budget: double-buffered in/out blocks plus ~3 live (TM, 512)
            # f32 intermediates at tile_p=1024 (~14 MiB); comfortable margin
            # on all of v5e/v6e and under v7x's 64 MiB physical VMEM.
            vmem_limit_bytes=40 * 1024 * 1024),
    )(x_packed, w_bd, b_p, pool, gbcast, beta_p)

    # Unpack (free reshape), drop padding, restore module output layout.
    out = out.reshape(n_rows_pad, d_model)[:n_rows]
    return out.reshape(batch, ts_dim, seg_num, d_model)


def init_params(key, seg_len, d_model, hidden=64):
    """Deterministic synthetic init mirroring nn.Linear / nn.LayerNorm shapes."""
    k1, k2, k3, k4 = jax.random.split(key, 4)
    bound1 = 1.0 / (seg_len ** 0.5)
    bound2 = 1.0 / (hidden ** 0.5)
    w1 = jax.random.uniform(k1, (seg_len, hidden), jnp.float32, -bound1, bound1)
    b1 = jax.random.uniform(k2, (1, hidden), jnp.float32, -bound1, bound1)
    w2 = jax.random.uniform(k3, (hidden, d_model), jnp.float32, -bound2, bound2)
    b2 = jax.random.uniform(k4, (1, d_model), jnp.float32, -bound2, bound2)
    gamma = jnp.ones((1, d_model), jnp.float32)
    beta = jnp.zeros((1, d_model), jnp.float32)
    return (w1, b1, w2, b2, gamma, beta)


def reference(x, params, seg_len, d_model):
    """Pure-JAX f32 reference of the PyTorch forward (unfolded Linears)."""
    batch, ts_len, ts_dim = x.shape
    seg_num = ts_len // seg_len
    w1, b1, w2, b2, gamma, beta = params
    x_seg = (x.reshape(batch, seg_num, seg_len, ts_dim)
               .transpose(0, 3, 1, 2)
               .reshape(batch * ts_dim * seg_num, seg_len)
               .astype(jnp.float32))
    y = x_seg @ w1 + b1
    y = y @ w2 + b2
    mean = jnp.mean(y, axis=-1, keepdims=True)
    var = jnp.mean((y - mean) ** 2, axis=-1, keepdims=True)
    y = (y - mean) / jnp.sqrt(var + 1e-5) * gamma + beta
    return y.reshape(batch, ts_dim, seg_num, d_model)


if __name__ == "__main__":
    # Small shapes consistent with the module: seg_len=8, d_model=32
    batch, ts_dim = 2, 4
    seg_len, seg_num = 8, 2
    ts_len = seg_len * seg_num      # 16
    d_model = 32

    key = jax.random.PRNGKey(0)
    kx, kp = jax.random.split(key)
    x = jax.random.normal(kx, (batch, ts_len, ts_dim), dtype=jnp.float32)
    params = init_params(kp, seg_len, d_model)

    out = dsw_embedding(x, params, seg_len, d_model)
    out = jax.block_until_ready(out)

    ref = reference(x, params, seg_len, d_model)
    assert out.shape == (batch, ts_dim, seg_num, d_model)
    # bf16 MXU operands + bf16 output dominate the tolerance (LayerNorm output
    # is O(1); expected error a few 1e-3 relative).
    assert jnp.allclose(out.astype(jnp.float32), ref, atol=5e-2, rtol=5e-2), \
        "mismatch vs reference"
    print("KERNEL_OK")
</pallas_src>

<mosaic_0001>
module attributes {stable_mosaic.version = 11 : i64} {
  func.func @dsw_embed_kernel(%arg0: i32, %arg1: memref<8x128xbf16, #tpu.memory_space<vmem>>, %arg2: memref<128x512xbf16, #tpu.memory_space<vmem>>, %arg3: memref<1x512xf32, #tpu.memory_space<vmem>>, %arg4: memref<512x16xbf16, #tpu.memory_space<vmem>>, %arg5: memref<16x512xbf16, #tpu.memory_space<vmem>>, %arg6: memref<1x512xf32, #tpu.memory_space<vmem>>, %arg7: memref<8x512xbf16, #tpu.memory_space<vmem>>) attributes {dimension_semantics = [#tpu.dimension_semantics<parallel>], iteration_bounds = array<i64: 1>, scalar_prefetch = 0 : i64, scratch_operands = 0 : i64, tpu.core_type = #tpu.core_type<tc>, window_params = [{transform_indices = @transform_0, window_bounds = array<i64: 8, 128>}, {pipeline_mode = #tpu.pipeline_mode<synchronous>, transform_indices = @transform_1, window_bounds = array<i64: 128, 512>}, {pipeline_mode = #tpu.pipeline_mode<synchronous>, transform_indices = @transform_2, window_bounds = array<i64: 1, 512>}, {pipeline_mode = #tpu.pipeline_mode<synchronous>, transform_indices = @transform_3, window_bounds = array<i64: 512, 16>}, {pipeline_mode = #tpu.pipeline_mode<synchronous>, transform_indices = @transform_4, window_bounds = array<i64: 16, 512>}, {pipeline_mode = #tpu.pipeline_mode<synchronous>, transform_indices = @transform_5, window_bounds = array<i64: 1, 512>}, {transform_indices = @transform_6, window_bounds = array<i64: 8, 512>}]} {
    %c0 = arith.constant 0 : index
    %c0_0 = arith.constant 0 : index
    %0 = vector.load %arg1[%c0, %c0_0] : memref<8x128xbf16, #tpu.memory_space<vmem>>, vector<8x128xbf16>
    %c0_1 = arith.constant 0 : index
    %c0_2 = arith.constant 0 : index
    %1 = vector.load %arg2[%c0_1, %c0_2] : memref<128x512xbf16, #tpu.memory_space<vmem>>, vector<128x512xbf16>
    %cst = arith.constant dense<0.000000e+00> : vector<8x512xf32>
    %2 = tpu.matmul %0, %1, %cst {dimension_numbers = #tpu.dot_dimension_numbers<[1], [0], [0], [1], [0, 0, 1, 1], [], []>} : vector<8x128xbf16>, vector<128x512xbf16>, vector<8x512xf32> -> vector<8x512xf32>
    %c0_3 = arith.constant 0 : index
    %c0_4 = arith.constant 0 : index
    %3 = vector.load %arg3[%c0_3, %c0_4] : memref<1x512xf32, #tpu.memory_space<vmem>>, vector<1x512xf32>
    %4 = vector.broadcast %3 : vector<1x512xf32> to vector<8x512xf32>
    %5 = arith.addf %2, %4 : vector<8x512xf32>
    %6 = arith.truncf %5 : vector<8x512xf32> to vector<8x512xbf16>
    %7 = arith.mulf %6, %6 : vector<8x512xbf16>
    %c0_5 = arith.constant 0 : index
    %c0_6 = arith.constant 0 : index
    %8 = vector.load %arg4[%c0_5, %c0_6] : memref<512x16xbf16, #tpu.memory_space<vmem>>, vector<512x16xbf16>
    %cst_7 = arith.constant dense<0.000000e+00> : vector<8x16xf32>
    %9 = tpu.matmul %7, %8, %cst_7 {dimension_numbers = #tpu.dot_dimension_numbers<[1], [0], [0], [1], [0, 0, 1, 1], [], []>} : vector<8x512xbf16>, vector<512x16xbf16>, vector<8x16xf32> -> vector<8x16xf32>
    %cst_8 = arith.constant 9.99999974E-6 : f32
    %10 = vector.broadcast %cst_8 : f32 to vector<8x16xf32>
    %11 = arith.addf %9, %10 : vector<8x16xf32>
    %12 = math.rsqrt %11 : vector<8x16xf32>
    %13 = arith.truncf %12 : vector<8x16xf32> to vector<8x16xbf16>
    %c0_9 = arith.constant 0 : index
    %c0_10 = arith.constant 0 : index
    %14 = vector.load %arg5[%c0_9, %c0_10] : memref<16x512xbf16, #tpu.memory_space<vmem>>, vector<16x512xbf16>
    %cst_11 = arith.constant dense<0.000000e+00> : vector<8x512xf32>
    %15 = tpu.matmul %13, %14, %cst_11 {dimension_numbers = #tpu.dot_dimension_numbers<[1], [0], [0], [1], [0, 0, 1, 1], [], []>} : vector<8x16xbf16>, vector<16x512xbf16>, vector<8x512xf32> -> vector<8x512xf32>
    %16 = arith.mulf %5, %15 : vector<8x512xf32>
    %c0_12 = arith.constant 0 : index
    %c0_13 = arith.constant 0 : index
    %17 = vector.load %arg6[%c0_12, %c0_13] : memref<1x512xf32, #tpu.memory_space<vmem>>, vector<1x512xf32>
    %18 = vector.broadcast %17 : vector<1x512xf32> to vector<8x512xf32>
    %19 = arith.addf %16, %18 : vector<8x512xf32>
    %20 = arith.truncf %19 : vector<8x512xf32> to vector<8x512xbf16>
    %c0_14 = arith.constant 0 : index
    %c0_15 = arith.constant 0 : index
    %21 = vector.load %arg7[%c0_14, %c0_15] : memref<8x512xbf16, #tpu.memory_space<vmem>>, vector<8x512xbf16>
    tpu.vector_store %arg7[%c0_14, %c0_15], %20 {strides = array<i32>} : memref<8x512xbf16, #tpu.memory_space<vmem>>, vector<8x512xbf16>,
    return
  }
  func.func @transform_0(%arg0: i32) -> (i32, i32) {
    %c0_i32 = arith.constant 0 : i32
    %c0_i32_0 = arith.constant 0 : i32
    return %arg0, %c0_i32 : i32, i32
  }
  func.func @transform_1(%arg0: i32) -> (i32, i32) {
    %c0_i32 = arith.constant 0 : i32
    %c0_i32_0 = arith.constant 0 : i32
    %c0_i32_1 = arith.constant 0 : i32
    return %c0_i32, %c0_i32_0 : i32, i32
  }
  func.func @transform_2(%arg0: i32) -> (i32, i32) {
    %c0_i32 = arith.constant 0 : i32
    %c0_i32_0 = arith.constant 0 : i32
    %c0_i32_1 = arith.constant 0 : i32
    return %c0_i32, %c0_i32_0 : i32, i32
  }
  func.func @transform_3(%arg0: i32) -> (i32, i32) {
    %c0_i32 = arith.constant 0 : i32
    %c0_i32_0 = arith.constant 0 : i32
    %c0_i32_1 = arith.constant 0 : i32
    return %c0_i32, %c0_i32_0 : i32, i32
  }
  func.func @transform_4(%arg0: i32) -> (i32, i32) {
    %c0_i32 = arith.constant 0 : i32
    %c0_i32_0 = arith.constant 0 : i32
    %c0_i32_1 = arith.constant 0 : i32
    return %c0_i32, %c0_i32_0 : i32, i32
  }
  func.func @transform_5(%arg0: i32) -> (i32, i32) {
    %c0_i32 = arith.constant 0 : i32
    %c0_i32_0 = arith.constant 0 : i32
    %c0_i32_1 = arith.constant 0 : i32
    return %c0_i32, %c0_i32_0 : i32, i32
  }
  func.func @transform_6(%arg0: i32) -> (i32, i32) {
    %c0_i32 = arith.constant 0 : i32
    %c0_i32_0 = arith.constant 0 : i32
    return %arg0, %c0_i32 : i32, i32
  }
}

</mosaic_0001>

<llo_original>
// kernel: tpu_custom_call.1
$region0: #{tpu_custom_call.1}
  #allocation0 [shape = 'u32[]', space=smem, size = 0x4, offset = 0x4, fixed_abs, tag = 'smem constant byte address 0x4 - core index']
  #allocation1 [shape = 'u32[72,128]{1,0:T(1,128)}', space=vmem, size = 0x9000, scoped, tag = 'internal scratch']
  %s0 = inlined_call_operand.hbm [shape: bf16[8,128], index: 0, kind: input, shape index: {}]
  %s1 = inlined_call_operand.vmem [shape: bf16[128,512], index: 1, kind: input, shape index: {}]
  %s2 = inlined_call_operand.hbm [shape: f32[1,512], index: 2, kind: input, shape index: {}]
  %s3 = inlined_call_operand.vmem [shape: bf16[512,16], index: 3, kind: input, shape index: {}]
  %s4 = inlined_call_operand.vmem [shape: bf16[16,512], index: 4, kind: input, shape index: {}]
  %s5 = inlined_call_operand.hbm [shape: f32[1,512], index: 5, kind: input, shape index: {}]
  %s6 = inlined_call_operand.hbm [shape: bf16[8,512], index: 6, kind: output, shape index: {}]
  %s7 = sld [smem:[#allocation0]]
  $region46: #{tpu_custom_call.1} parent=0
    _
  %s9 = ssub.s32 1, %s7
  %s10 = scalar_select 0, %s9, %s7
  $region1: #{tpu_custom_call.1} parent=0
    #allocation2 [shape = 'u8[2048]{0}', space=vmem, size = 0x800, scoped, tag = 'input window, operand 0, single buffered']
    #allocation3 [shape = 's32[1]{0}', space=sflag, size = 0x4, scoped, tag = 'scoped memory for tpu_custom_call.1']
    #allocation4 [shape = 's32[1]{0}', space=sflag, size = 0x4, scoped, tag = 'scoped memory for tpu_custom_call.1']
    #allocation5 [shape = 'u8[2048]{0}', space=vmem, size = 0x800, scoped, tag = 'input window, operand 2, single buffered']
    #allocation6 [shape = 's32[1]{0}', space=sflag, size = 0x4, scoped, tag = 'scoped memory for tpu_custom_call.1']
    #allocation7 [shape = 'u8[2048]{0}', space=vmem, size = 0x800, scoped, tag = 'input window, operand 5, single buffered']
    #allocation8 [shape = 'u8[8192]{0}', space=vmem, size = 0x2000, scoped, tag = 'output window, operand 0, single buffered']
    %11 = vsyncpa [#allocation3], 0
    %12 = vsyncpa [#allocation6], 0
    %13 = vsyncpa [#allocation4], 0
    // Predicated region
    $region2: #{tpu_custom_call.1} parent=1 // pred_check
      _
    $region3: #{tpu_custom_call.1} parent=1 // pred_check_branch
      %15 = sbr.rel (0) target = $region5
    $region4: #{tpu_custom_call.1} parent=1 // pred_region
      %17 = vsyncadd [#allocation3], 0
      %s19 = sshll.u32 %s0, 4
      %s20 = int_to_ptr.hbm [resolvable:$true] %s19
      %s21 = sshll.u32 [#allocation2], 4
      %s22 = int_to_ptr.vmem [resolvable:$true] %s21
      %24 = dma.hbm_to_vmem [thread:$0]  %s20, 64, %s22, [#allocation3]
    $region5: #{tpu_custom_call.1} parent=1 // pred_fallthru
      _
    // Predicated region
    $region6: #{tpu_custom_call.1} parent=1 // pred_check
      _
    $region7: #{tpu_custom_call.1} parent=1 // pred_check_branch
      %26 = sbr.rel (0) target = $region9
    $region8: #{tpu_custom_call.1} parent=1 // pred_region
      _
    $region9: #{tpu_custom_call.1} parent=1 // pred_fallthru
      _
    // Predicated region
    $region10: #{tpu_custom_call.1} parent=1 // pred_check
      _
    $region11: #{tpu_custom_call.1} parent=1 // pred_check_branch
      %28 = sbr.rel (0) target = $region13
    $region12: #{tpu_custom_call.1} parent=1 // pred_region
      %30 = vsyncadd [#allocation6], 0
      %s32 = sshll.u32 %s2, 4
      %s33 = int_to_ptr.hbm [resolvable:$true] %s32
      %s34 = sshll.u32 [#allocation5], 4
      %s35 = int_to_ptr.vmem [resolvable:$true] %s34
      %37 = dma.hbm_to_vmem [thread:$0]  %s33, 64, %s35, [#allocation6]
    $region13: #{tpu_custom_call.1} parent=1 // pred_fallthru
      _
    // Predicated region
    $region14: #{tpu_custom_call.1} parent=1 // pred_check
      _
    $region15: #{tpu_custom_call.1} parent=1 // pred_check_branch
      %39 = sbr.rel (0) target = $region17
    $region16: #{tpu_custom_call.1} parent=1 // pred_region
      _
    $region17: #{tpu_custom_call.1} parent=1 // pred_fallthru
      _
    // Predicated region
    $region18: #{tpu_custom_call.1} parent=1 // pred_check
      _
    $region19: #{tpu_custom_call.1} parent=1 // pred_check_branch
      %41 = sbr.rel (0) target = $region21
    $region20: #{tpu_custom_call.1} parent=1 // pred_region
      _
    $region21: #{tpu_custom_call.1} parent=1 // pred_fallthru
      _
    // Predicated region
    $region22: #{tpu_custom_call.1} parent=1 // pred_check
      _
    $region23: #{tpu_custom_call.1} parent=1 // pred_check_branch
      %43 = sbr.rel (0) target = $region25
    $region24: #{tpu_custom_call.1} parent=1 // pred_region
      %45 = vsyncadd [#allocation6], 0
      %s47 = sshll.u32 %s5, 4
      %s48 = int_to_ptr.hbm [resolvable:$true] %s47
      %s49 = sshll.u32 [#allocation7], 4
      %s50 = int_to_ptr.vmem [resolvable:$true] %s49
      %52 = dma.hbm_to_vmem [thread:$0]  %s48, 64, %s50, [#allocation6]
    $region25: #{tpu_custom_call.1} parent=1 // pred_fallthru
      _
    // Predicated region
    $region26: #{tpu_custom_call.1} parent=1 // pred_check
      _
    $region27: #{tpu_custom_call.1} parent=1 // pred_check_branch
      %54 = sbr.rel (0) target = $region29
    $region28: #{tpu_custom_call.1} parent=1 // pred_region
      %56 = dma.done [#allocation3], 64
    $region29: #{tpu_custom_call.1} parent=1 // pred_fallthru
      _
    // Predicated region
    $region30: #{tpu_custom_call.1} parent=1 // pred_check
      _
    $region31: #{tpu_custom_call.1} parent=1 // pred_check_branch
      %58 = sbr.rel (0) target = $region33
    $region32: #{tpu_custom_call.1} parent=1 // pred_region
      %60 = dma.done [#allocation6], 64
    $region33: #{tpu_custom_call.1} parent=1 // pred_fallthru
      _
    // Predicated region
    $region34: #{tpu_custom_call.1} parent=1 // pred_check
      _
    $region35: #{tpu_custom_call.1} parent=1 // pred_check_branch
      %62 = sbr.rel (0) target = $region37
    $region36: #{tpu_custom_call.1} parent=1 // pred_region
      %64 = dma.done [#allocation6], 64
    $region37: #{tpu_custom_call.1} parent=1 // pred_fallthru
      _
    %v66 = vld [vmem:[#allocation2] sm:$0xf]
    %v67 = vld [vmem:[%s1] sm:$0xff]
    %v68 = vld [vmem:[%s1 + $0x8] sm:$0xff]
    %v69 = vld [vmem:[%s1 + $0x10] sm:$0xff]
    %v70 = vld [vmem:[%s1 + $0x18] sm:$0xff]
    %v71 = vld [vmem:[%s1 + $0x20] sm:$0xff]
    %v72 = vld [vmem:[%s1 + $0x28] sm:$0xff]
    %v73 = vld [vmem:[%s1 + $0x30] sm:$0xff]
    %v74 = vld [vmem:[%s1 + $0x38] sm:$0xff]
    %v75 = vld [vmem:[%s1 + $0x40] sm:$0xff]
    %v76 = vld [vmem:[%s1 + $0x48] sm:$0xff]
    %v77 = vld [vmem:[%s1 + $0x50] sm:$0xff]
    %v78 = vld [vmem:[%s1 + $0x58] sm:$0xff]
    %v79 = vld [vmem:[%s1 + $0x60] sm:$0xff]
    %v80 = vld [vmem:[%s1 + $0x68] sm:$0xff]
    %v81 = vld [vmem:[%s1 + $0x70] sm:$0xff]
    %v82 = vld [vmem:[%s1 + $0x78] sm:$0xff]
    %v83 = vld [vmem:[%s1 + $0x80] sm:$0xff]
    %v84 = vld [vmem:[%s1 + $0x88] sm:$0xff]
    %v85 = vld [vmem:[%s1 + $0x90] sm:$0xff]
    %v86 = vld [vmem:[%s1 + $0x98] sm:$0xff]
    %v87 = vld [vmem:[%s1 + $0xa0] sm:$0xff]
    %v88 = vld [vmem:[%s1 + $0xa8] sm:$0xff]
    %v89 = vld [vmem:[%s1 + $0xb0] sm:$0xff]
    %v90 = vld [vmem:[%s1 + $0xb8] sm:$0xff]
    %v91 = vld [vmem:[%s1 + $0xc0] sm:$0xff]
    %v92 = vld [vmem:[%s1 + $0xc8] sm:$0xff]
    %v93 = vld [vmem:[%s1 + $0xd0] sm:$0xff]
    %v94 = vld [vmem:[%s1 + $0xd8] sm:$0xff]
    %v95 = vld [vmem:[%s1 + $0xe0] sm:$0xff]
    %v96 = vld [vmem:[%s1 + $0xe8] sm:$0xff]
    %v97 = vld [vmem:[%s1 + $0xf0] sm:$0xff]
    %v98 = vld [vmem:[%s1 + $0xf8] sm:$0xff]
    %v99 = vld [vmem:[#allocation5] sm:$0xf]
    %v101 = vperm.slane %v99, 0
    %v102 = vperm.slane %v99, 1
    %v103 = vperm.slane %v99, 2
    %v104 = vperm.slane %v99, 3
    %v141 = vunpack.c.l.b16 %v67
    %v142 = vunpack.c.h.b16 %v67
    %v143 = vunpack.c.l.b16 %v68
    %v144 = vunpack.c.h.b16 %v68
    %v145 = vunpack.c.l.b16 %v69
    %v146 = vunpack.c.h.b16 %v69
    %v147 = vunpack.c.l.b16 %v70
    %v148 = vunpack.c.h.b16 %v70
    %v149 = vunpack.c.l.b16 %v71
    %v150 = vunpack.c.h.b16 %v71
    %v151 = vunpack.c.l.b16 %v72
    %v152 = vunpack.c.h.b16 %v72
    %v153 = vunpack.c.l.b16 %v73
    %v154 = vunpack.c.h.b16 %v73
    %v155 = vunpack.c.l.b16 %v74
    %v156 = vunpack.c.h.b16 %v74
    %v157 = vunpack.c.l.b16 %v75
    %v158 = vunpack.c.h.b16 %v75
    %v159 = vunpack.c.l.b16 %v76
    %v160 = vunpack.c.h.b16 %v76
    %v161 = vunpack.c.l.b16 %v77
    %v162 = vunpack.c.h.b16 %v77
    %v163 = vunpack.c.l.b16 %v78
    %v164 = vunpack.c.h.b16 %v78
    %v165 = vunpack.c.l.b16 %v79
    %v166 = vunpack.c.h.b16 %v79
    %v167 = vunpack.c.l.b16 %v80
    %v168 = vunpack.c.h.b16 %v80
    %v169 = vunpack.c.l.b16 %v81
    %v170 = vunpack.c.h.b16 %v81
    %v171 = vunpack.c.l.b16 %v82
    %v172 = vunpack.c.h.b16 %v82
    %v173 = vunpack.c.l.b16 %v83
    %v174 = vunpack.c.h.b16 %v83
    %v175 = vunpack.c.l.b16 %v84
    %v176 = vunpack.c.h.b16 %v84
    %v177 = vunpack.c.l.b16 %v85
    %v178 = vunpack.c.h.b16 %v85
    %v179 = vunpack.c.l.b16 %v86
    %v180 = vunpack.c.h.b16 %v86
    %v181 = vunpack.c.l.b16 %v87
    %v182 = vunpack.c.h.b16 %v87
    %v183 = vunpack.c.l.b16 %v88
    %v184 = vunpack.c.h.b16 %v88
    %v185 = vunpack.c.l.b16 %v89
    %v186 = vunpack.c.h.b16 %v89
    %v187 = vunpack.c.l.b16 %v90
    %v188 = vunpack.c.h.b16 %v90
    %v189 = vunpack.c.l.b16 %v91
    %v190 = vunpack.c.h.b16 %v91
    %v191 = vunpack.c.l.b16 %v92
    %v192 = vunpack.c.h.b16 %v92
    %v193 = vunpack.c.l.b16 %v93
    %v194 = vunpack.c.h.b16 %v93
    %v195 = vunpack.c.l.b16 %v94
    %v196 = vunpack.c.h.b16 %v94
    %v197 = vunpack.c.l.b16 %v95
    %v198 = vunpack.c.h.b16 %v95
    %v199 = vunpack.c.l.b16 %v96
    %v200 = vunpack.c.h.b16 %v96
    %v201 = vunpack.c.l.b16 %v97
    %v202 = vunpack.c.h.b16 %v97
    %v203 = vunpack.c.l.b16 %v98
    %v204 = vunpack.c.h.b16 %v98
    %v205 = vpack.c.b16 %v145, %v141
    %v206 = vpack.c.b16 %v146, %v142
    %v207 = vpack.c.b16 %v147, %v143
    %v208 = vpack.c.b16 %v148, %v144
    %v209 = vpack.c.b16 %v153, %v149
    %v210 = vpack.c.b16 %v154, %v150
    %v211 = vpack.c.b16 %v155, %v151
    %v212 = vpack.c.b16 %v156, %v152
    %v213 = vpack.c.b16 %v161, %v157
    %v214 = vpack.c.b16 %v162, %v158
    %v215 = vpack.c.b16 %v163, %v159
    %v216 = vpack.c.b16 %v164, %v160
    %v217 = vpack.c.b16 %v169, %v165
    %v218 = vpack.c.b16 %v170, %v166
    %v219 = vpack.c.b16 %v171, %v167
    %v220 = vpack.c.b16 %v172, %v168
    %v221 = vpack.c.b16 %v177, %v173
    %v222 = vpack.c.b16 %v178, %v174
    %v223 = vpack.c.b16 %v179, %v175
    %v224 = vpack.c.b16 %v180, %v176
    %v225 = vpack.c.b16 %v185, %v181
    %v226 = vpack.c.b16 %v186, %v182
    %v227 = vpack.c.b16 %v187, %v183
    %v228 = vpack.c.b16 %v188, %v184
    %v229 = vpack.c.b16 %v193, %v189
    %v230 = vpack.c.b16 %v194, %v190
    %v231 = vpack.c.b16 %v195, %v191
    %v232 = vpack.c.b16 %v196, %v192
    %v233 = vpack.c.b16 %v201, %v197
    %v234 = vpack.c.b16 %v202, %v198
    %v235 = vpack.c.b16 %v203, %v199
    %v236 = vpack.c.b16 %v204, %v200
    %269 = vmatpush.bf16.msra.mxu0 %v233
    %270 = vmatpush.bf16.msra.mxu0 %v229
    %271 = vmatpush.bf16.msra.mxu0 %v225
    %272 = vmatpush.bf16.msra.mxu0 %v221
    %273 = vmatpush.bf16.msra.mxu0 %v217
    %274 = vmatpush.bf16.msra.mxu0 %v213
    %275 = vmatpush.bf16.msra.mxu0 %v209
    %276 = vmatpush.bf16.msra.mxu0 %v205
    %277 = vmatmul.bf16.gmra.mxu0 %v66
    %v278 = vpop.f32.mrf.mxu0
    %v279 = vadd.f32 %v101, %v278
    %v280 = vpop.f32.mrf.mxu0
    %281 = vdwg.mxu0
    %282 = vmatpush.bf16.msra.mxu0 %v234
    %283 = vmatpush.bf16.msra.mxu0 %v230
    %284 = vmatpush.bf16.msra.mxu0 %v226
    %285 = vmatpush.bf16.msra.mxu0 %v222
    %286 = vmatpush.bf16.msra.mxu0 %v218
    %287 = vmatpush.bf16.msra.mxu0 %v214
    %288 = vmatpush.bf16.msra.mxu0 %v210
    %289 = vmatpush.bf16.msra.mxu0 %v206
    %290 = vmatmul.bf16.gmra.mxu0 %v66
    %v291 = vpop.f32.mrf.mxu0
    %v292 = vadd.f32 %v102, %v291
    %v293 = vpop.f32.mrf.mxu0
    %294 = vdwg.mxu0
    %295 = vmatpush.bf16.msra.mxu0 %v235
    %296 = vmatpush.bf16.msra.mxu0 %v231
    %297 = vmatpush.bf16.msra.mxu0 %v227
    %298 = vmatpush.bf16.msra.mxu0 %v223
    %299 = vmatpush.bf16.msra.mxu0 %v219
    %300 = vmatpush.bf16.msra.mxu0 %v215
    %301 = vmatpush.bf16.msra.mxu0 %v211
    %302 = vmatpush.bf16.msra.mxu0 %v207
    %303 = vmatmul.bf16.gmra.mxu0 %v66
    %v304 = vpop.f32.mrf.mxu0
    %v305 = vadd.f32 %v103, %v304
    %v306 = vpop.f32.mrf.mxu0
    %307 = vdwg.mxu0
    %308 = vmatpush.bf16.msra.mxu0 %v236
    %309 = vmatpush.bf16.msra.mxu0 %v232
    %310 = vmatpush.bf16.msra.mxu0 %v228
    %311 = vmatpush.bf16.msra.mxu0 %v224
    %312 = vmatpush.bf16.msra.mxu0 %v220
    %313 = vmatpush.bf16.msra.mxu0 %v216
    %314 = vmatpush.bf16.msra.mxu0 %v212
    %315 = vmatpush.bf16.msra.mxu0 %v208
    %316 = vmatmul.bf16.gmra.mxu0 %v66
    %v317 = vpop.f32.mrf.mxu0
    %v318 = vadd.f32 %v104, %v317
    %v319 = vpop.f32.mrf.mxu0
    %320 = vdwg.mxu0
    %v321 = vpack.c.bf16 %v292, %v279
    %v322 = vpack.c.bf16 %v318, %v305
    %v323 = vunpack.c.l.bf16 %v321
    %v324 = vunpack.c.h.bf16 %v321
    %v325 = vunpack.c.l.bf16 %v322
    %v326 = vunpack.c.h.bf16 %v322
    %v327 = vmul.f32 %v323, %v323
    %v328 = vmul.f32 %v324, %v324
    %v329 = vmul.f32 %v325, %v325
    %v330 = vmul.f32 %v326, %v326
    %v331 = vpack.c.bf16 %v327, %v327
    %v332 = vpack.c.bf16 %v328, %v328
    %v333 = vpack.c.bf16 %v329, %v329
    %v334 = vpack.c.bf16 %v330, %v330
    %v335 = vld [vmem:[%s3] sm:$0xf]
    %v336 = vld [vmem:[%s3 + $0x4] sm:$0xf]
    %v337 = vld [vmem:[%s3 + $0x8] sm:$0xf]
    %v338 = vld [vmem:[%s3 + $0xc] sm:$0xf]
    %v339 = vld [vmem:[%s3 + $0x10] sm:$0xf]
    %v340 = vld [vmem:[%s3 + $0x14] sm:$0xf]
    %v341 = vld [vmem:[%s3 + $0x18] sm:$0xf]
    %v342 = vld [vmem:[%s3 + $0x1c] sm:$0xf]
    %v343 = vld [vmem:[%s3 + $0x20] sm:$0xf]
    %v344 = vld [vmem:[%s3 + $0x24] sm:$0xf]
    %v345 = vld [vmem:[%s3 + $0x28] sm:$0xf]
    %v346 = vld [vmem:[%s3 + $0x2c] sm:$0xf]
    %v347 = vld [vmem:[%s3 + $0x30] sm:$0xf]
    %v348 = vld [vmem:[%s3 + $0x34] sm:$0xf]
    %v349 = vld [vmem:[%s3 + $0x38] sm:$0xf]
    %v350 = vld [vmem:[%s3 + $0x3c] sm:$0xf]
    %v351 = vld [vmem:[%s3 + $0x40] sm:$0xf]
    %v352 = vld [vmem:[%s3 + $0x44] sm:$0xf]
    %v353 = vld [vmem:[%s3 + $0x48] sm:$0xf]
    %v354 = vld [vmem:[%s3 + $0x4c] sm:$0xf]
    %v355 = vld [vmem:[%s3 + $0x50] sm:$0xf]
    %v356 = vld [vmem:[%s3 + $0x54] sm:$0xf]
    %v357 = vld [vmem:[%s3 + $0x58] sm:$0xf]
    %v358 = vld [vmem:[%s3 + $0x5c] sm:$0xf]
    %v359 = vld [vmem:[%s3 + $0x60] sm:$0xf]
    %v360 = vld [vmem:[%s3 + $0x64] sm:$0xf]
    %v361 = vld [vmem:[%s3 + $0x68] sm:$0xf]
    %v362 = vld [vmem:[%s3 + $0x6c] sm:$0xf]
    %v363 = vld [vmem:[%s3 + $0x70] sm:$0xf]
    %v364 = vld [vmem:[%s3 + $0x74] sm:$0xf]
    %v365 = vld [vmem:[%s3 + $0x78] sm:$0xf]
    %v366 = vld [vmem:[%s3 + $0x7c] sm:$0xf]
    %v367 = vld [vmem:[%s3 + $0x80] sm:$0xf]
    %v368 = vld [vmem:[%s3 + $0x84] sm:$0xf]
    %v369 = vld [vmem:[%s3 + $0x88] sm:$0xf]
    %v370 = vld [vmem:[%s3 + $0x8c] sm:$0xf]
    %v371 = vld [vmem:[%s3 + $0x90] sm:$0xf]
    %v372 = vld [vmem:[%s3 + $0x94] sm:$0xf]
    %v373 = vld [vmem:[%s3 + $0x98] sm:$0xf]
    %v374 = vld [vmem:[%s3 + $0x9c] sm:$0xf]
    %v375 = vld [vmem:[%s3 + $0xa0] sm:$0xf]
    %v376 = vld [vmem:[%s3 + $0xa4] sm:$0xf]
    %v377 = vld [vmem:[%s3 + $0xa8] sm:$0xf]
    %v378 = vld [vmem:[%s3 + $0xac] sm:$0xf]
    %v379 = vld [vmem:[%s3 + $0xb0] sm:$0xf]
    %v380 = vld [vmem:[%s3 + $0xb4] sm:$0xf]
    %v381 = vld [vmem:[%s3 + $0xb8] sm:$0xf]
    %v382 = vld [vmem:[%s3 + $0xbc] sm:$0xf]
    %v383 = vld [vmem:[%s3 + $0xc0] sm:$0xf]
    %v384 = vld [vmem:[%s3 + $0xc4] sm:$0xf]
    %v385 = vld [vmem:[%s3 + $0xc8] sm:$0xf]
    %v386 = vld [vmem:[%s3 + $0xcc] sm:$0xf]
    %v387 = vld [vmem:[%s3 + $0xd0] sm:$0xf]
    %v388 = vld [vmem:[%s3 + $0xd4] sm:$0xf]
    %v389 = vld [vmem:[%s3 + $0xd8] sm:$0xf]
    %v390 = vld [vmem:[%s3 + $0xdc] sm:$0xf]
    %v391 = vld [vmem:[%s3 + $0xe0] sm:$0xf]
    %v392 = vld [vmem:[%s3 + $0xe4] sm:$0xf]
    %v393 = vld [vmem:[%s3 + $0xe8] sm:$0xf]
    %v394 = vld [vmem:[%s3 + $0xec] sm:$0xf]
    %v395 = vld [vmem:[%s3 + $0xf0] sm:$0xf]
    %v396 = vld [vmem:[%s3 + $0xf4] sm:$0xf]
    %v397 = vld [vmem:[%s3 + $0xf8] sm:$0xf]
    %v398 = vld [vmem:[%s3 + $0xfc] sm:$0xf]
    %v463 = vunpack.c.l.b16 %v335
    %v464 = vunpack.c.l.b16 %v336
    %v465 = vunpack.c.l.b16 %v337
    %v466 = vunpack.c.l.b16 %v338
    %v467 = vunpack.c.l.b16 %v339
    %v468 = vunpack.c.l.b16 %v340
    %v469 = vunpack.c.l.b16 %v341
    %v470 = vunpack.c.l.b16 %v342
    %v471 = vunpack.c.l.b16 %v343
    %v472 = vunpack.c.l.b16 %v344
    %v473 = vunpack.c.l.b16 %v345
    %v474 = vunpack.c.l.b16 %v346
    %v475 = vunpack.c.l.b16 %v347
    %v476 = vunpack.c.l.b16 %v348
    %v477 = vunpack.c.l.b16 %v349
    %v478 = vunpack.c.l.b16 %v350
    %v479 = vunpack.c.l.b16 %v351
    %v480 = vunpack.c.l.b16 %v352
    %v481 = vunpack.c.l.b16 %v353
    %v482 = vunpack.c.l.b16 %v354
    %v483 = vunpack.c.l.b16 %v355
    %v484 = vunpack.c.l.b16 %v356
    %v485 = vunpack.c.l.b16 %v357
    %v486 = vunpack.c.l.b16 %v358
    %v487 = vunpack.c.l.b16 %v359
    %v488 = vunpack.c.l.b16 %v360
    %v489 = vunpack.c.l.b16 %v361
    %v490 = vunpack.c.l.b16 %v362
    %v491 = vunpack.c.l.b16 %v363
    %v492 = vunpack.c.l.b16 %v364
    %v493 = vunpack.c.l.b16 %v365
    %v494 = vunpack.c.l.b16 %v366
    %v495 = vunpack.c.l.b16 %v367
    %v496 = vunpack.c.l.b16 %v368
    %v497 = vunpack.c.l.b16 %v369
    %v498 = vunpack.c.l.b16 %v370
    %v499 = vunpack.c.l.b16 %v371
    %v500 = vunpack.c.l.b16 %v372
    %v501 = vunpack.c.l.b16 %v373
    %v502 = vunpack.c.l.b16 %v374
    %v503 = vunpack.c.l.b16 %v375
    %v504 = vunpack.c.l.b16 %v376
    %v505 = vunpack.c.l.b16 %v377
    %v506 = vunpack.c.l.b16 %v378
    %v507 = vunpack.c.l.b16 %v379
    %v508 = vunpack.c.l.b16 %v380
    %v509 = vunpack.c.l.b16 %v381
    %v510 = vunpack.c.l.b16 %v382
    %v511 = vunpack.c.l.b16 %v383
    %v512 = vunpack.c.l.b16 %v384
    %v513 = vunpack.c.l.b16 %v385
    %v514 = vunpack.c.l.b16 %v386
    %v515 = vunpack.c.l.b16 %v387
    %v516 = vunpack.c.l.b16 %v388
    %v517 = vunpack.c.l.b16 %v389
    %v518 = vunpack.c.l.b16 %v390
    %v519 = vunpack.c.l.b16 %v391
    %v520 = vunpack.c.l.b16 %v392
    %v521 = vunpack.c.l.b16 %v393
    %v522 = vunpack.c.l.b16 %v394
    %v523 = vunpack.c.l.b16 %v395
    %v524 = vunpack.c.l.b16 %v396
    %v525 = vunpack.c.l.b16 %v397
    %v526 = vunpack.c.l.b16 %v398
    %v527 = vpack.c.b16 %v464, %v463
    %v528 = vpack.c.b16 %v466, %v465
    %v529 = vpack.c.b16 %v468, %v467
    %v530 = vpack.c.b16 %v470, %v469
    %v531 = vpack.c.b16 %v472, %v471
    %v532 = vpack.c.b16 %v474, %v473
    %v533 = vpack.c.b16 %v476, %v475
    %v534 = vpack.c.b16 %v478, %v477
    %v535 = vpack.c.b16 %v480, %v479
    %v536 = vpack.c.b16 %v482, %v481
    %v537 = vpack.c.b16 %v484, %v483
    %v538 = vpack.c.b16 %v486, %v485
    %v539 = vpack.c.b16 %v488, %v487
    %v540 = vpack.c.b16 %v490, %v489
    %v541 = vpack.c.b16 %v492, %v491
    %v542 = vpack.c.b16 %v494, %v493
    %v543 = vpack.c.b16 %v496, %v495
    %v544 = vpack.c.b16 %v498, %v497
    %v545 = vpack.c.b16 %v500, %v499
    %v546 = vpack.c.b16 %v502, %v501
    %v547 = vpack.c.b16 %v504, %v503
    %v548 = vpack.c.b16 %v506, %v505
    %v549 = vpack.c.b16 %v508, %v507
    %v550 = vpack.c.b16 %v510, %v509
    %v551 = vpack.c.b16 %v512, %v511
    %v552 = vpack.c.b16 %v514, %v513
    %v553 = vpack.c.b16 %v516, %v515
    %v554 = vpack.c.b16 %v518, %v517
    %v555 = vpack.c.b16 %v520, %v519
    %v556 = vpack.c.b16 %v522, %v521
    %v557 = vpack.c.b16 %v524, %v523
    %v558 = vpack.c.b16 %v526, %v525
    %591 = vmatpush.bf16.msra.mxu0 %v534
    %592 = vmatpush.bf16.msra.mxu0 %v533
    %593 = vmatpush.bf16.msra.mxu0 %v532
    %594 = vmatpush.bf16.msra.mxu0 %v531
    %595 = vmatpush.bf16.msra.mxu0 %v530
    %596 = vmatpush.bf16.msra.mxu0 %v529
    %597 = vmatpush.bf16.msra.mxu0 %v528
    %598 = vmatpush.bf16.msra.mxu0 %v527
    %599 = vmatmul.bf16.gmra.mxu0 %v331
    %v600 = vpop.f32.mrf.mxu0
    %v601 = vadd.f32 1e-05, %v600
    %v602 = vpop.f32.mrf.mxu0
    %603 = vdwg.mxu0
    %604 = vmatpush.bf16.msra.mxu0 %v542
    %605 = vmatpush.bf16.msra.mxu0 %v541
    %606 = vmatpush.bf16.msra.mxu0 %v540
    %607 = vmatpush.bf16.msra.mxu0 %v539
    %608 = vmatpush.bf16.msra.mxu0 %v538
    %609 = vmatpush.bf16.msra.mxu0 %v537
    %610 = vmatpush.bf16.msra.mxu0 %v536
    %611 = vmatpush.bf16.msra.mxu0 %v535
    %612 = vmatmul.bf16.gmra.mxu0 %v332
    %v613 = vpop.f32.mrf.mxu0
    %v614 = vadd.f32 %v601, %v613
    %v615 = vpop.f32.mrf.mxu0
    %616 = vdwg.mxu0
    %617 = vmatpush.bf16.msra.mxu0 %v550
    %618 = vmatpush.bf16.msra.mxu0 %v549
    %619 = vmatpush.bf16.msra.mxu0 %v548
    %620 = vmatpush.bf16.msra.mxu0 %v547
    %621 = vmatpush.bf16.msra.mxu0 %v546
    %622 = vmatpush.bf16.msra.mxu0 %v545
    %623 = vmatpush.bf16.msra.mxu0 %v544
    %624 = vmatpush.bf16.msra.mxu0 %v543
    %625 = vmatmul.bf16.gmra.mxu0 %v333
    %v626 = vpop.f32.mrf.mxu0
    %v627 = vadd.f32 %v614, %v626
    %v628 = vpop.f32.mrf.mxu0
    %629 = vdwg.mxu0
    %630 = vmatpush.bf16.msra.mxu0 %v558
    %631 = vmatpush.bf16.msra.mxu0 %v557
    %632 = vmatpush.bf16.msra.mxu0 %v556
    %633 = vmatpush.bf16.msra.mxu0 %v555
    %634 = vmatpush.bf16.msra.mxu0 %v554
    %635 = vmatpush.bf16.msra.mxu0 %v553
    %636 = vmatpush.bf16.msra.mxu0 %v552
    %637 = vmatpush.bf16.msra.mxu0 %v551
    %638 = vmatmul.bf16.gmra.mxu0 %v334
    %v639 = vpop.f32.mrf.mxu0
    %v640 = vadd.f32 %v627, %v639
    %v641 = vpop.f32.mrf.mxu0
    %642 = vdwg.mxu0
    %v643 = vrsqrt.pop %v640
    %v644 = vmul.f32 %v643, %v640
    %v645 = vmul.f32 %v644, %v643
    %v646 = vmul.f32 0.5, %v645
    %v647 = vsub.f32 1.5, %v646
    %v648 = vmul.f32 %v643, %v647
    %vm649 = vweird.f32 %v640
    %vm650 = vweird.f32 %v643
    %vm651 = vmor %vm649, %vm650
    %v652 = vsel %vm651, %v643, %v648
    %v653 = vpack.c.bf16 %v652, %v652
    %v654 = vld [vmem:[%s4] sm:$0xff]
    %v655 = vld [vmem:[%s4 + $0x8] sm:$0xff]
    %v656 = vld [vmem:[%s4 + $0x10] sm:$0xff]
    %v657 = vld [vmem:[%s4 + $0x18] sm:$0xff]
    %v662 = vunpack.c.l.b16 %v654
    %v663 = vunpack.c.h.b16 %v654
    %v664 = vunpack.c.l.b16 %v655
    %v665 = vunpack.c.h.b16 %v655
    %v666 = vunpack.c.l.b16 %v656
    %v667 = vunpack.c.h.b16 %v656
    %v668 = vunpack.c.l.b16 %v657
    %v669 = vunpack.c.h.b16 %v657
    %v670 = vpack.c.b16 %v666, %v662
    %v671 = vpack.c.b16 %v667, %v663
    %v672 = vpack.c.b16 %v668, %v664
    %v673 = vpack.c.b16 %v669, %v665
    %vm678 = vcmask 130048
    %v680 = vsel %vm678, %v653, 0
    %682 = vmatpush.bf16.msra.mxu0 0
    %683 = vmatpush.bf16.msra.mxu0 0
    %684 = vmatpush.bf16.msra.mxu0 0
    %685 = vmatpush.bf16.msra.mxu0 0
    %686 = vmatpush.bf16.msra.mxu0 0
    %687 = vmatpush.bf16.msra.mxu0 0
    %688 = vmatpush.bf16.msra.mxu0 0
    %689 = vmatpush.bf16.msra.mxu0 %v670
    %690 = vmatmul.bf16.gmra.mxu0 %v680
    %v691 = vpop.f32.mrf.mxu0
    %v692 = vadd.f32 0.0, %v691
    %v693 = vpop.f32.mrf.mxu0
    %694 = vdwg.mxu0
    %695 = vmatpush.bf16.msra.mxu0 0
    %696 = vmatpush.bf16.msra.mxu0 0
    %697 = vmatpush.bf16.msra.mxu0 0
    %698 = vmatpush.bf16.msra.mxu0 0
    %699 = vmatpush.bf16.msra.mxu0 0
    %700 = vmatpush.bf16.msra.mxu0 0
    %701 = vmatpush.bf16.msra.mxu0 0
    %702 = vmatpush.bf16.msra.mxu0 %v671
    %703 = vmatmul.bf16.gmra.mxu0 %v680
    %v704 = vpop.f32.mrf.mxu0
    %v705 = vadd.f32 0.0, %v704
    %v706 = vpop.f32.mrf.mxu0
    %707 = vdwg.mxu0
    %708 = vmatpush.bf16.msra.mxu0 0
    %709 = vmatpush.bf16.msra.mxu0 0
    %710 = vmatpush.bf16.msra.mxu0 0
    %711 = vmatpush.bf16.msra.mxu0 0
    %712 = vmatpush.bf16.msra.mxu0 0
    %713 = vmatpush.bf16.msra.mxu0 0
    %714 = vmatpush.bf16.msra.mxu0 0
    %715 = vmatpush.bf16.msra.mxu0 %v672
    %716 = vmatmul.bf16.gmra.mxu0 %v680
    %v717 = vpop.f32.mrf.mxu0
    %v718 = vadd.f32 0.0, %v717
    %v719 = vpop.f32.mrf.mxu0
    %720 = vdwg.mxu0
    %721 = vmatpush.bf16.msra.mxu0 0
    %722 = vmatpush.bf16.msra.mxu0 0
    %723 = vmatpush.bf16.msra.mxu0 0
    %724 = vmatpush.bf16.msra.mxu0 0
    %725 = vmatpush.bf16.msra.mxu0 0
    %726 = vmatpush.bf16.msra.mxu0 0
    %727 = vmatpush.bf16.msra.mxu0 0
    %728 = vmatpush.bf16.msra.mxu0 %v673
    %729 = vmatmul.bf16.gmra.mxu0 %v680
    %v730 = vpop.f32.mrf.mxu0
    %v731 = vadd.f32 0.0, %v730
    %v732 = vpop.f32.mrf.mxu0
    %733 = vdwg.mxu0
    %v734 = vmul.f32 %v279, %v692
    %v735 = vmul.f32 %v292, %v705
    %v736 = vmul.f32 %v305, %v718
    %v737 = vmul.f32 %v318, %v731
    %v738 = vld [vmem:[#allocation7] sm:$0xf]
    %v740 = vperm.slane %v738, 0
    %v741 = vperm.slane %v738, 1
    %v742 = vperm.slane %v738, 2
    %v743 = vperm.slane %v738, 3
    %v748 = vadd.f32 %v734, %v740
    %v749 = vadd.f32 %v735, %v741
    %v750 = vadd.f32 %v736, %v742
    %v751 = vadd.f32 %v737, %v743
    %v752 = vpack.c.bf16 %v749, %v748
    %v753 = vpack.c.bf16 %v751, %v750
    %754 = vst [vmem:[#allocation8] sm:$0xff] %v752
    %755 = vst [vmem:[#allocation8 + $0x8] sm:$0xff] %v753
    // Predicated region
    $region38: #{tpu_custom_call.1} parent=1 // pred_check
      _
    $region39: #{tpu_custom_call.1} parent=1 // pred_check_branch
      %757 = sbr.rel (0) target = $region41
    $region40: #{tpu_custom_call.1} parent=1 // pred_region
      %759 = vsyncadd [#allocation4], 0
      %s761 = sshll.u32 [#allocation8], 4
      %s762 = int_to_ptr.vmem [resolvable:$true] %s761
      %s763 = sshll.u32 %s6, 4
      %s764 = int_to_ptr.hbm [resolvable:$true] %s763
      %766 = dma.vmem_to_hbm [thread:$0]  %s762, 256, %s764, [#allocation4]
    $region41: #{tpu_custom_call.1} parent=1 // pred_fallthru
      _
    // Predicated region
    $region42: #{tpu_custom_call.1} parent=1 // pred_check
      _
    $region43: #{tpu_custom_call.1} parent=1 // pred_check_branch
      %768 = sbr.rel (0) target = $region45
    $region44: #{tpu_custom_call.1} parent=1 // pred_region
      %770 = dma.done [#allocation4], 256
    $region45: #{tpu_custom_call.1} parent=1 // pred_fallthru
      _
    %771 = vsyncpa [#allocation3], 1
    %772 = vsyncpa [#allocation6], 1
    %773 = vsyncpa [#allocation4], 1

</llo_original>
